<compile_context>
chip_gen: v7x
topology: tpu7x:2x2x1
jax: 0.10.0
libtpu: 0.0.40
codegen_flags: <defaults>
</compile_context>

<pallas_src>
import jax
import jax.numpy as jnp
from jax.experimental import pallas as pl
from jax.experimental.pallas import tpu as pltpu

EPS = 1e-5  # nn.LayerNorm default


def _round_up(v, m):
    return ((v + m - 1) // m) * m


def _vmem_budget_bytes():
    """Usable VMEM budget derived from the chip, with headroom for compiler
    scratch / double-buffering (~62% of capacity: ~40 MiB on a 64 MiB v7x TC,
    ~80 MiB on 128 MiB v5e/v6e)."""
    cap = 64 * 1024 * 1024  # conservative fallback (v7x per-TC)
    try:
        info = pltpu.get_tpu_info()
        cap = int(getattr(info, "vmem_capacity_bytes", cap)) or cap
    except Exception:
        pass
    return int(cap * 0.62)


def _prenorm_linear_kernel_full(x_ref, w_ref, b_ref, o_ref):
    """W fully resident: one grid axis over row tiles."""
    # x_ref: (tm, D); w_ref: (D, D_out); b_ref: (1, D_out) f32
    x = x_ref[...].astype(jnp.float32)
    mean = jnp.mean(x, axis=-1, keepdims=True)
    centered = x - mean
    var = jnp.mean(centered * centered, axis=-1, keepdims=True)
    x_hat = centered * jax.lax.rsqrt(var + EPS)
    w = w_ref[...]
    out = jnp.dot(x_hat.astype(w.dtype), w, preferred_element_type=jnp.float32)
    o_ref[...] = (out + b_ref[...]).astype(o_ref.dtype)


def _prenorm_linear_kernel_coltiled(x_ref, w_ref, b_ref, o_ref, y_scr):
    """Column-tiled W: grid = (row tiles, col tiles), j innermost ('arbitrary').
    LayerNorm is computed once per row tile (j == 0) into VMEM scratch."""
    @pl.when(pl.program_id(1) == 0)
    def _():
        x = x_ref[...].astype(jnp.float32)
        mean = jnp.mean(x, axis=-1, keepdims=True)
        centered = x - mean
        var = jnp.mean(centered * centered, axis=-1, keepdims=True)
        x_hat = centered * jax.lax.rsqrt(var + EPS)
        y_scr[...] = x_hat.astype(y_scr.dtype)

    out = jnp.dot(y_scr[...], w_ref[...], preferred_element_type=jnp.float32)
    o_ref[...] = (out + b_ref[...]).astype(o_ref.dtype)


def prenorm_linear(x, gamma, beta, w, b, *, tile_rows=512, compute_dtype=None,
                   vmem_budget_bytes=None, force_tile_cols=None):
    """x: [B, N, D] -> [B, N, D_out].  Equivalent to Linear(LayerNorm(x))."""
    B, N, D = x.shape
    D_in, D_out = w.shape
    assert D_in == D, "Linear in_features must equal LayerNorm dim"
    rows = B * N

    if compute_dtype is None:
        # MXU runs in the weights' native dtype; pass jnp.bfloat16 explicitly
        # for the fast-MXU path when weights arrive as f32.
        compute_dtype = w.dtype
    if vmem_budget_bytes is None:
        vmem_budget_bytes = _vmem_budget_bytes()

    x_item = jnp.dtype(x.dtype).itemsize
    w_item = jnp.dtype(compute_dtype).itemsize
    o_item = jnp.dtype(x.dtype).itemsize

    # ---- fold the LayerNorm affine into the Linear (done once, in f32) ----
    #   (x_hat*gamma + beta) @ W + b  ==  x_hat @ (gamma[:,None]*W) + (beta@W + b)
    g32 = gamma.astype(jnp.float32).reshape(D, 1)
    be32 = beta.astype(jnp.float32).reshape(1, D)
    w32 = w.astype(jnp.float32)
    w_f = (g32 * w32).astype(compute_dtype)                       # (D, D_out)
    b_f = (be32 @ w32) + b.astype(jnp.float32).reshape(1, D_out)  # (1, D_out) f32

    x2 = x.reshape(rows, D)

    # ---- row tile: large (amortizes per-step overhead), multiple of 8 ----
    if rows <= tile_rows:
        tm = rows                       # single row tile == full dim, always legal
    else:
        tm = max(8, (int(tile_rows) // 8) * 8)

    # ---- column tiling decision from the VMEM budget ----
    dbl = 2  # double-buffered pipelined operands
    fixed = dbl * tm * D * x_item + tm * D * w_item          # x tiles + LN scratch
    per_col = dbl * (D * w_item + 4 + tm * o_item)           # W col + bias + out col
    full_fits = fixed + per_col * D_out <= vmem_budget_bytes

    if full_fits and force_tile_cols is None:
        # W fully resident: read from HBM exactly once, pure x-streaming kernel.
        grid = (pl.cdiv(rows, tm),)
        out2 = pl.pallas_call(
            _prenorm_linear_kernel_full,
            out_shape=jax.ShapeDtypeStruct((rows, D_out), x.dtype),
            grid=grid,
            in_specs=[
                pl.BlockSpec((tm, D), lambda i: (i, 0)),        # x row tile (streamed)
                pl.BlockSpec((D, D_out), lambda i: (0, 0)),     # W (resident)
                pl.BlockSpec((1, D_out), lambda i: (0, 0)),     # folded bias (resident)
            ],
            out_specs=pl.BlockSpec((tm, D_out), lambda i: (i, 0)),
            compiler_params=pltpu.CompilerParams(
                dimension_semantics=("parallel",),
                vmem_limit_bytes=vmem_budget_bytes,
            ),
        )(x2, w_f, b_f)
    else:
        # Column-tiled fallback for very large D * D_out: j innermost and
        # 'arbitrary' so the cached LayerNorm scratch is legally reused across j.
        avail = max(vmem_budget_bytes - fixed, per_col * 128)
        tn = max(128, (int(avail // per_col) // 128) * 128)
        if force_tile_cols is not None:
            tn = min(tn, _round_up(int(force_tile_cols), 128))
        tn = min(tn, _round_up(D_out, 128))

        grid = (pl.cdiv(rows, tm), pl.cdiv(D_out, tn))
        out2 = pl.pallas_call(
            _prenorm_linear_kernel_coltiled,
            out_shape=jax.ShapeDtypeStruct((rows, D_out), x.dtype),
            grid=grid,
            in_specs=[
                pl.BlockSpec((tm, D), lambda i, j: (i, 0)),     # x row tile
                pl.BlockSpec((D, tn), lambda i, j: (0, j)),     # W column tile
                pl.BlockSpec((1, tn), lambda i, j: (0, j)),     # folded bias column tile
            ],
            out_specs=pl.BlockSpec((tm, tn), lambda i, j: (i, j)),
            scratch_shapes=[pltpu.VMEM((tm, D), compute_dtype)],  # cached LN output
            compiler_params=pltpu.CompilerParams(
                dimension_semantics=("parallel", "arbitrary"),
                vmem_limit_bytes=vmem_budget_bytes,
            ),
        )(x2, w_f, b_f)

    return out2.reshape(B, N, D_out)


def prenorm_linear_ref(x, gamma, beta, w, b):
    """Pure-JAX reference: Linear(LayerNorm(x))."""
    x32 = x.astype(jnp.float32)
    mean = jnp.mean(x32, axis=-1, keepdims=True)
    var = jnp.mean((x32 - mean) ** 2, axis=-1, keepdims=True)
    y = (x32 - mean) / jnp.sqrt(var + EPS) * gamma.astype(jnp.float32) + beta.astype(jnp.float32)
    return (y @ w.astype(jnp.float32) + b.astype(jnp.float32)).astype(x.dtype)


if __name__ == "__main__":
    key = jax.random.PRNGKey(0)
    kx, kw, kb, kg, kbt, kw2, kb2 = jax.random.split(key, 7)

    # ---- test 1: small ViT-like shapes, full-W-resident path ----
    B, N, D, D_OUT = 2, 8, 32, 32
    x = jax.random.normal(kx, (B, N, D), dtype=jnp.float32)
    gamma = 1.0 + 0.1 * jax.random.normal(kg, (D,), dtype=jnp.float32)
    beta = 0.1 * jax.random.normal(kbt, (D,), dtype=jnp.float32)
    w = jax.random.normal(kw, (D, D_OUT), dtype=jnp.float32) / jnp.sqrt(D)
    b = jax.random.normal(kb, (D_OUT,), dtype=jnp.float32) * 0.01

    out = jax.block_until_ready(prenorm_linear(x, gamma, beta, w, b))
    ref = prenorm_linear_ref(x, gamma, beta, w, b)
    assert out.shape == (B, N, D_OUT)
    assert jnp.allclose(out, ref, atol=1e-4, rtol=1e-4), "mismatch vs reference (full path)"

    # ---- test 2: exercise the column-tiled path (cached-LN scratch) ----
    D_OUT2 = 256
    w2 = jax.random.normal(kw2, (D, D_OUT2), dtype=jnp.float32) / jnp.sqrt(D)
    b2 = jax.random.normal(kb2, (D_OUT2,), dtype=jnp.float32) * 0.01
    out2 = jax.block_until_ready(
        prenorm_linear(x, gamma, beta, w2, b2, force_tile_cols=128))
    ref2 = prenorm_linear_ref(x, gamma, beta, w2, b2)
    assert out2.shape == (B, N, D_OUT2)
    assert jnp.allclose(out2, ref2, atol=1e-4, rtol=1e-4), "mismatch vs reference (tiled path)"

    print("KERNEL_OK")
</pallas_src>

<mosaic_0001>
module attributes {stable_mosaic.version = 11 : i64} {
  func.func @_prenorm_linear_kernel_full(%arg0: i32, %arg1: memref<16x32xf32, #tpu.memory_space<vmem>>, %arg2: memref<32x32xf32, #tpu.memory_space<vmem>>, %arg3: memref<1x32xf32, #tpu.memory_space<vmem>>, %arg4: memref<16x32xf32, #tpu.memory_space<vmem>>) attributes {dimension_semantics = [#tpu.dimension_semantics<parallel>], iteration_bounds = array<i64: 1>, scalar_prefetch = 0 : i64, scratch_operands = 0 : i64, tpu.core_type = #tpu.core_type<tc>, window_params = [{transform_indices = @transform_0, window_bounds = array<i64: 16, 32>}, {pipeline_mode = #tpu.pipeline_mode<synchronous>, transform_indices = @transform_1, window_bounds = array<i64: 32, 32>}, {pipeline_mode = #tpu.pipeline_mode<synchronous>, transform_indices = @transform_2, window_bounds = array<i64: 1, 32>}, {transform_indices = @transform_3, window_bounds = array<i64: 16, 32>}]} {
    %c0 = arith.constant 0 : index
    %c0_0 = arith.constant 0 : index
    %0 = vector.load %arg1[%c0, %c0_0] : memref<16x32xf32, #tpu.memory_space<vmem>>, vector<16x32xf32>
    %cst = arith.constant dense<0.000000e+00> : vector<16xf32>
    %1 = vector.multi_reduction <add>, %0, %cst [1] : vector<16x32xf32> to vector<16xf32>
    %2 = vector.shape_cast %1 : vector<16xf32> to vector<16x1xf32>
    %cst_1 = arith.constant 3.200000e+01 : f32
    %3 = vector.broadcast %cst_1 : f32 to vector<16x1xf32>
    %4 = arith.divf %2, %3 : vector<16x1xf32>
    %5 = vector.broadcast %4 : vector<16x1xf32> to vector<16x32xf32>
    %6 = arith.subf %0, %5 : vector<16x32xf32>
    %7 = arith.mulf %6, %6 : vector<16x32xf32>
    %cst_2 = arith.constant dense<0.000000e+00> : vector<16xf32>
    %8 = vector.multi_reduction <add>, %7, %cst_2 [1] : vector<16x32xf32> to vector<16xf32>
    %9 = vector.shape_cast %8 : vector<16xf32> to vector<16x1xf32>
    %cst_3 = arith.constant 3.200000e+01 : f32
    %10 = vector.broadcast %cst_3 : f32 to vector<16x1xf32>
    %11 = arith.divf %9, %10 : vector<16x1xf32>
    %cst_4 = arith.constant 9.99999974E-6 : f32
    %12 = vector.broadcast %cst_4 : f32 to vector<16x1xf32>
    %13 = arith.addf %11, %12 : vector<16x1xf32>
    %14 = math.rsqrt %13 : vector<16x1xf32>
    %15 = vector.broadcast %14 : vector<16x1xf32> to vector<16x32xf32>
    %16 = arith.mulf %6, %15 : vector<16x32xf32>
    %c0_5 = arith.constant 0 : index
    %c0_6 = arith.constant 0 : index
    %17 = vector.load %arg2[%c0_5, %c0_6] : memref<32x32xf32, #tpu.memory_space<vmem>>, vector<32x32xf32>
    %cst_7 = arith.constant dense<0.000000e+00> : vector<16x32xf32>
    %18 = tpu.matmul %16, %17, %cst_7 {dimension_numbers = #tpu.dot_dimension_numbers<[1], [0], [0], [1], [0, 0, 1, 1], [], []>} : vector<16x32xf32>, vector<32x32xf32>, vector<16x32xf32> -> vector<16x32xf32>
    %c0_8 = arith.constant 0 : index
    %c0_9 = arith.constant 0 : index
    %19 = vector.load %arg3[%c0_8, %c0_9] : memref<1x32xf32, #tpu.memory_space<vmem>>, vector<1x32xf32>
    %20 = vector.broadcast %19 : vector<1x32xf32> to vector<16x32xf32>
    %21 = arith.addf %18, %20 : vector<16x32xf32>
    %c0_10 = arith.constant 0 : index
    %c0_11 = arith.constant 0 : index
    %22 = vector.load %arg4[%c0_10, %c0_11] : memref<16x32xf32, #tpu.memory_space<vmem>>, vector<16x32xf32>
    tpu.vector_store %arg4[%c0_10, %c0_11], %21 {strides = array<i32>} : memref<16x32xf32, #tpu.memory_space<vmem>>, vector<16x32xf32>,
    return
  }
  func.func @transform_0(%arg0: i32) -> (i32, i32) {
    %c0_i32 = arith.constant 0 : i32
    %c0_i32_0 = arith.constant 0 : i32
    return %arg0, %c0_i32 : i32, i32
  }
  func.func @transform_1(%arg0: i32) -> (i32, i32) {
    %c0_i32 = arith.constant 0 : i32
    %c0_i32_0 = arith.constant 0 : i32
    %c0_i32_1 = arith.constant 0 : i32
    return %c0_i32, %c0_i32_0 : i32, i32
  }
  func.func @transform_2(%arg0: i32) -> (i32, i32) {
    %c0_i32 = arith.constant 0 : i32
    %c0_i32_0 = arith.constant 0 : i32
    %c0_i32_1 = arith.constant 0 : i32
    return %c0_i32, %c0_i32_0 : i32, i32
  }
  func.func @transform_3(%arg0: i32) -> (i32, i32) {
    %c0_i32 = arith.constant 0 : i32
    %c0_i32_0 = arith.constant 0 : i32
    return %arg0, %c0_i32 : i32, i32
  }
}

</mosaic_0001>

<llo_original>
// kernel: tpu_custom_call.1
$region0: #{tpu_custom_call.1}
  #allocation0 [shape = 'u32[]', space=smem, size = 0x4, offset = 0x4, fixed_abs, tag = 'smem constant byte address 0x4 - core index']
  #allocation1 [shape = 'u32[144,128]{1,0:T(1,128)}', space=vmem, size = 0x12000, scoped, tag = 'internal scratch']
  %s0 = inlined_call_operand.hbm [shape: f32[16,32], index: 0, kind: input, shape index: {}]
  %s1 = inlined_call_operand.hbm [shape: f32[32,32], index: 1, kind: input, shape index: {}]
  %s2 = inlined_call_operand.vmem [shape: f32[1,32], index: 2, kind: input, shape index: {}]
  %s3 = inlined_call_operand.hbm [shape: f32[16,32], index: 3, kind: output, shape index: {}]
  %s4 = sld [smem:[#allocation0]]
  $region30: #{tpu_custom_call.1} parent=0
    _
  %s6 = ssub.s32 1, %s4
  %s7 = scalar_select 0, %s6, %s4
  $region1: #{tpu_custom_call.1} parent=0
    #allocation2 [shape = 'u8[8192]{0}', space=vmem, size = 0x2000, scoped, tag = 'input window, operand 0, single buffered']
    #allocation3 [shape = 's32[1]{0}', space=sflag, size = 0x4, scoped, tag = 'scoped memory for tpu_custom_call.1']
    #allocation4 [shape = 's32[1]{0}', space=sflag, size = 0x4, scoped, tag = 'scoped memory for tpu_custom_call.1']
    #allocation5 [shape = 'u8[16384]{0}', space=vmem, size = 0x4000, scoped, tag = 'input window, operand 1, single buffered']
    #allocation6 [shape = 's32[1]{0}', space=sflag, size = 0x4, scoped, tag = 'scoped memory for tpu_custom_call.1']
    #allocation7 [shape = 'u8[8192]{0}', space=vmem, size = 0x2000, scoped, tag = 'output window, operand 0, single buffered']
    %8 = vsyncpa [#allocation3], 0
    %9 = vsyncpa [#allocation6], 0
    %10 = vsyncpa [#allocation4], 0
    // Predicated region
    $region2: #{tpu_custom_call.1} parent=1 // pred_check
      _
    $region3: #{tpu_custom_call.1} parent=1 // pred_check_branch
      %12 = sbr.rel (0) target = $region5
    $region4: #{tpu_custom_call.1} parent=1 // pred_region
      %s14 = ssub.s32 256, 256
      %15 = vsyncadd [#allocation3], %s14
      %s16 = sshll.u32 [#allocation2], 4
      %s17 = int_to_ptr.vmem [resolvable:$true] %s16
      %22 = dma.hbm_to_vmem [thread:$0]  %s0, 256, %s17, [#allocation3], 128, 128, 8
    $region5: #{tpu_custom_call.1} parent=1 // pred_fallthru
      _
    // Predicated region
    $region6: #{tpu_custom_call.1} parent=1 // pred_check
      _
    $region7: #{tpu_custom_call.1} parent=1 // pred_check_branch
      %24 = sbr.rel (0) target = $region9
    $region8: #{tpu_custom_call.1} parent=1 // pred_region
      %s26 = ssub.s32 512, 512
      %27 = vsyncadd [#allocation6], %s26
      %s28 = sshll.u32 [#allocation5], 4
      %s29 = int_to_ptr.vmem [resolvable:$true] %s28
      %34 = dma.hbm_to_vmem [thread:$0]  %s1, 512, %s29, [#allocation6], 128, 128, 8
    $region9: #{tpu_custom_call.1} parent=1 // pred_fallthru
      _
    // Predicated region
    $region10: #{tpu_custom_call.1} parent=1 // pred_check
      _
    $region11: #{tpu_custom_call.1} parent=1 // pred_check_branch
      %36 = sbr.rel (0) target = $region13
    $region12: #{tpu_custom_call.1} parent=1 // pred_region
      _
    $region13: #{tpu_custom_call.1} parent=1 // pred_fallthru
      _
    // Predicated region
    $region14: #{tpu_custom_call.1} parent=1 // pred_check
      _
    $region15: #{tpu_custom_call.1} parent=1 // pred_check_branch
      %38 = sbr.rel (0) target = $region17
    $region16: #{tpu_custom_call.1} parent=1 // pred_region
      %39 = dma.done [#allocation3], 256
    $region17: #{tpu_custom_call.1} parent=1 // pred_fallthru
      _
    // Predicated region
    $region18: #{tpu_custom_call.1} parent=1 // pred_check
      _
    $region19: #{tpu_custom_call.1} parent=1 // pred_check_branch
      %41 = sbr.rel (0) target = $region21
    $region20: #{tpu_custom_call.1} parent=1 // pred_region
      %42 = dma.done [#allocation6], 512
    $region21: #{tpu_custom_call.1} parent=1 // pred_fallthru
      _
    %v43 = vld [vmem:[#allocation2] sm:$0xff]
    %v44 = vld [vmem:[#allocation2 + $0x8] sm:$0xff]
    %vm45 = vcmask 261120
    %v46 = vsel %vm45, %v43, 0.0
    %47 = vadd.xlane.f32.xlu0 %v46
    %v48 = vpop.xlane.xlu0 %47
    %v49 = vsel %vm45, %v44, 0.0
    %50 = vadd.xlane.f32.xlu0 %v49
    %v51 = vpop.xlane.xlu0 %50
    %v52 = vrcp.pop 32.0
    %v53 = vmul.f32 %v48, %v52
    %v54 = vmul.f32 %v51, %v52
    %v55 = vsub.f32 %v43, %v53
    %v56 = vsub.f32 %v44, %v54
    %v57 = vmul.f32 %v55, %v55
    %v58 = vmul.f32 %v56, %v56
    %v59 = vsel %vm45, %v57, 0.0
    %60 = vadd.xlane.f32.xlu0 %v59
    %v61 = vpop.xlane.xlu0 %60
    %v62 = vsel %vm45, %v58, 0.0
    %63 = vadd.xlane.f32.xlu0 %v62
    %v64 = vpop.xlane.xlu0 %63
    %v65 = vmul.f32 %v61, %v52
    %v66 = vmul.f32 %v64, %v52
    %v67 = vadd.f32 %v65, 1e-05
    %v68 = vadd.f32 %v66, 1e-05
    %v69 = vrsqrt.pop %v67
    %v70 = vrsqrt.pop %v68
    %v71 = vmul.f32 %v55, %v69
    %v72 = vmul.f32 %v56, %v70
    %v73 = vld [vmem:[#allocation5] sm:$0xff]
    %v74 = vld [vmem:[#allocation5 + $0x8] sm:$0xff]
    %v75 = vld [vmem:[#allocation5 + $0x10] sm:$0xff]
    %v76 = vld [vmem:[#allocation5 + $0x18] sm:$0xff]
    %v77 = vld [vmem:[%s2] sm:$0x1]
    %v79 = vlaneseq
    %v80 = vshrl.u32 %v79, 7
    %v81 = vsub.s32 0, %v80
    %v82 = vrot.slane %v77, %v81
    %v85 = vsel %vm45, %v71, 0
    %v88 = vsel %vm45, %v72, 0
    %90 = vmatprep.subr.mxu0 0.0
    %91 = vmatpush1.msra.mxu0 %v73
    %92 = vmatprep.subr.mxu0 0.0
    %93 = vmatpush1.msra.mxu0 %v74
    %94 = vmatprep.subr.mxu0 0.0
    %95 = vmatpush1.msra.mxu0 %v75
    %96 = vmatprep.subr.mxu0 0.0
    %97 = vmatpush1.msra.mxu0 %v76
    %98 = vmatprep.subr.mxu0 0.0
    %99 = vmatpush1.msra.mxu0 0.0
    %100 = vmatprep.subr.mxu0 0.0
    %101 = vmatpush1.msra.mxu0 0.0
    %102 = vmatprep.subr.mxu0 0.0
    %103 = vmatpush1.msra.mxu0 0.0
    %104 = vmatprep.subr.mxu0 0.0
    %105 = vmatpush1.msra.mxu0 0.0
    %106 = vmatprep.subr.mxu0 0.0
    %107 = vmatpush1.msra.mxu0 0.0
    %108 = vmatprep.subr.mxu0 0.0
    %109 = vmatpush1.msra.mxu0 0.0
    %110 = vmatprep.subr.mxu0 0.0
    %111 = vmatpush1.msra.mxu0 0.0
    %112 = vmatprep.subr.mxu0 0.0
    %113 = vmatpush1.msra.mxu0 0.0
    %114 = vmatprep.subr.mxu0 0.0
    %115 = vmatpush1.msra.mxu0 0.0
    %116 = vmatprep.subr.mxu0 0.0
    %117 = vmatpush1.msra.mxu0 0.0
    %118 = vmatprep.subr.mxu0 0.0
    %119 = vmatpush1.msra.mxu0 0.0
    %120 = vmatprep.subr.mxu0 0.0
    %121 = vmatpush1.msra.mxu0 0.0
    %122 = vmatprep.subr.mxu0 0.0
    %123 = vmatpush1.msra.mxu0 0.0
    %124 = vmatprep.subr.mxu0 0.0
    %125 = vmatpush1.msra.mxu0 0.0
    %126 = vmatprep.subr.mxu0 0.0
    %127 = vmatpush1.msra.mxu0 0.0
    %128 = vmatprep.subr.mxu0 0.0
    %129 = vmatpush1.msra.mxu0 0.0
    %130 = vmatprep.subr.mxu0 0.0
    %131 = vmatpush1.msra.mxu0 0.0
    %132 = vmatprep.subr.mxu0 0.0
    %133 = vmatpush1.msra.mxu0 0.0
    %134 = vmatprep.subr.mxu0 0.0
    %135 = vmatpush1.msra.mxu0 0.0
    %136 = vmatprep.subr.mxu0 0.0
    %137 = vmatpush1.msra.mxu0 0.0
    %138 = vmatprep.subr.mxu0 0.0
    %139 = vmatpush1.msra.mxu0 0.0
    %140 = vmatprep.subr.mxu0 0.0
    %141 = vmatpush1.msra.mxu0 0.0
    %142 = vmatprep.subr.mxu0 0.0
    %143 = vmatpush1.msra.mxu0 0.0
    %144 = vmatprep.subr.mxu0 0.0
    %145 = vmatpush1.msra.mxu0 0.0
    %146 = vmatprep.subr.mxu0 0.0
    %147 = vmatpush1.msra.mxu0 0.0
    %148 = vmatprep.subr.mxu0 0.0
    %149 = vmatpush1.msra.mxu0 0.0
    %150 = vmatprep.subr.mxu0 0.0
    %151 = vmatpush1.msra.mxu0 0.0
    %152 = vmatprep.subr.mxu0 0.0
    %153 = vmatpush1.msra.mxu0 0.0
    %154 = vmatprep.mubr.f32.mxu0 0.0
    %155 = vmatmul.mubr.f32.gmra.mrb[0].mxu0 %v85
    %v156 = vpop.f32.mrb[0].mxu0
    %v157 = vadd.f32 %v82, %v156
    %v158 = vpop.f32.mrb[0].mxu0
    %159 = vmatprep.mubr.f32.mxu0 0.0
    %160 = vmatmul.mubr.f32.gmra.mrb[0].mxu0 %v88
    %v161 = vpop.f32.mrb[0].mxu0
    %v162 = vadd.f32 %v82, %v161
    %v163 = vpop.f32.mrb[0].mxu0
    %164 = vdwg.mxu0
    %165 = vst.msk [vmem:[#allocation7] sm:$0xff] %vm45, %v157
    %166 = vst.msk [vmem:[#allocation7 + $0x8] sm:$0xff] %vm45, %v162
    // Predicated region
    $region22: #{tpu_custom_call.1} parent=1 // pred_check
      _
    $region23: #{tpu_custom_call.1} parent=1 // pred_check_branch
      %168 = sbr.rel (0) target = $region25
    $region24: #{tpu_custom_call.1} parent=1 // pred_region
      %s170 = ssub.s32 256, 256
      %171 = vsyncadd [#allocation4], %s170
      %s172 = sshll.u32 [#allocation7], 4
      %s173 = int_to_ptr.vmem [resolvable:$true] %s172
      %178 = dma.vmem_to_hbm [thread:$0]  %s173, 256, %s3, [#allocation4], 128, 128, 8
    $region25: #{tpu_custom_call.1} parent=1 // pred_fallthru
      _
    // Predicated region
    $region26: #{tpu_custom_call.1} parent=1 // pred_check
      _
    $region27: #{tpu_custom_call.1} parent=1 // pred_check_branch
      %180 = sbr.rel (0) target = $region29
    $region28: #{tpu_custom_call.1} parent=1 // pred_region
      %181 = dma.done [#allocation4], 256
    $region29: #{tpu_custom_call.1} parent=1 // pred_fallthru
      _
    %182 = vsyncpa [#allocation3], 1
    %183 = vsyncpa [#allocation6], 1
    %184 = vsyncpa [#allocation4], 1

</llo_original>
